<compile_context>
chip_gen: v7x
topology: tpu7x:2x2x1
jax: 0.10.0
libtpu: 0.0.40
codegen_flags: <defaults>
</compile_context>

<pallas_src>
import jax
import jax.numpy as jnp
from jax import lax
from jax.experimental import pallas as pl
from jax.experimental.pallas import tpu as pltpu


def mlp_kernel(x_ref, w1_ref, b1_ref, w2_ref, b2_ref, o_ref):
    # x_ref:  (tb, input_dim)           activation tile (batch on sublanes)
    # w1_ref: (hidden_dim, input_dim)   == PyTorch linear1.weight (resident)
    # b1_ref: (hidden_dim, 1)
    # w2_ref: (hidden_dim, 1)           == PyTorch linear2.weight as a column
    # b2_ref: (1, 1)                    scalar in SMEM
    # o_ref:  (1, tb)                   lane-dense output (batch on lanes)
    x = x_ref[...]

    # Layer 1 on the MXU, computed transposed: contract the lane axes of both
    # operands (the standard q @ k^T flash-attention pattern -- no materialized
    # transpose of the big activation tile):
    #   hT[h, b] = sum_k W1[h, k] * x[b, k]
    hT = lax.dot_general(
        w1_ref[...], x,
        dimension_numbers=(((1,), (1,)), ((), ())),
        preferred_element_type=jnp.float32)              # (hidden, tb) f32
    hT = jnp.maximum(hT + b1_ref[...], 0.0)              # bias (lane bcast) + ReLU

    # Layer 2 (num_classes == 1): VPU multiply + XLU sublane reduction.
    # Stays lane-dense -- no MXU push/pop, no transpose, no masked lane stores.
    y = jnp.sum(hT * w2_ref[...], axis=0, keepdims=True)  # (1, tb)
    y = y + b2_ref[0, 0]
    o_ref[...] = jax.nn.sigmoid(y).astype(o_ref.dtype)


def mlp_forward(x, w1, b1, w2, b2, *, tb=512):
    """Fused MLP forward.

    x:  (B, input_dim) f32
    w1: (hidden_dim, input_dim)     -- PyTorch linear1.weight layout
    b1: (hidden_dim,)
    w2: (num_classes=1, hidden_dim) -- PyTorch linear2.weight layout
    b2: (num_classes=1,)
    returns (B, 1) f32
    """
    B, input_dim = x.shape
    hidden_dim = w1.shape[0]
    assert w1.shape == (hidden_dim, input_dim)
    assert w2.shape == (1, hidden_dim)

    # Tile selection: large enough to amortize the ~0.35us per-grid-step
    # overhead (tb=512 ~ 85% of HBM roofline), but clamped so the grid keeps
    # >= 2 steps whenever B allows it (keeps both v7x TensorCores busy).
    # Always a multiple of 128 so output blocks stay lane-dense.
    def _round_up(v, m):
        return ((v + m - 1) // m) * m

    tb_eff = max(128, min(tb, _round_up(pl.cdiv(B, 2), 128)))
    num_tiles = pl.cdiv(B, tb_eff)

    b1_col = b1.reshape(hidden_dim, 1)
    w2_col = w2.reshape(hidden_dim, 1)
    b2_s = b2.reshape(1, 1)

    # Memory-bound: the x stream dominates bytes_accessed; weights are tiny
    # and resident across grid steps. VMEM is never a constraint at this size.
    flops = 2 * B * input_dim * hidden_dim + 3 * B * hidden_dim + 4 * B
    bytes_accessed = 4 * (B * input_dim            # x
                          + hidden_dim * input_dim  # w1
                          + 2 * hidden_dim + 1      # b1, w2, b2
                          + B)                      # output
    cost = pl.CostEstimate(flops=flops, transcendentals=B,
                           bytes_accessed=bytes_accessed)

    out_row = pl.pallas_call(
        mlp_kernel,
        out_shape=jax.ShapeDtypeStruct((1, B), jnp.float32),
        grid_spec=pltpu.PrefetchScalarGridSpec(
            num_scalar_prefetch=0,
            grid=(num_tiles,),
            in_specs=[
                # batch tile of activations (ragged last block handled by Pallas)
                pl.BlockSpec((tb_eff, input_dim), lambda i: (i, 0)),
                # weights / biases: full blocks, resident across all grid steps
                pl.BlockSpec((hidden_dim, input_dim), lambda i: (0, 0)),
                pl.BlockSpec((hidden_dim, 1), lambda i: (0, 0)),
                pl.BlockSpec((hidden_dim, 1), lambda i: (0, 0)),
                # b2 as a scalar in SMEM (avoids a padded (8,128) VMEM tile)
                pl.BlockSpec((1, 1), lambda i: (0, 0),
                             memory_space=pltpu.MemorySpace.SMEM),
            ],
            out_specs=pl.BlockSpec((1, tb_eff), lambda i: (0, i)),
        ),
        compiler_params=pltpu.CompilerParams(
            dimension_semantics=("parallel",)),
        cost_estimate=cost,
    )(x, w1, b1_col, w2_col, b2_s)

    # (1, B) lane-dense slab -> (B, 1): pure reshape, no data movement.
    return out_row.reshape(B, 1)


if __name__ == "__main__":
    # Small shapes consistent with MLPModel(input_dim, hidden_dim, num_classes=1).
    # B=300 deliberately NOT a multiple of the tile: exercises the new
    # pad-free ragged-block path and gives a 2-step grid (tile clamps to 256,
    # so both v7x TensorCores would be busy).
    B, input_dim, hidden_dim, num_classes = 300, 32, 64, 1

    key = jax.random.PRNGKey(0)
    kx, kw1, kb1, kw2, kb2 = jax.random.split(key, 5)

    x = jax.random.normal(kx, (B, input_dim), dtype=jnp.float32)
    # Deterministic "init": uniform like PyTorch's default Linear init scale,
    # with weights in PyTorch's native (out_features, in_features) layout.
    lim1 = 1.0 / float(input_dim) ** 0.5
    lim2 = 1.0 / float(hidden_dim) ** 0.5
    w1 = jax.random.uniform(kw1, (hidden_dim, input_dim), jnp.float32, -lim1, lim1)
    b1 = jax.random.uniform(kb1, (hidden_dim,), jnp.float32, -lim1, lim1)
    w2 = jax.random.uniform(kw2, (num_classes, hidden_dim), jnp.float32, -lim2, lim2)
    b2 = jax.random.uniform(kb2, (num_classes,), jnp.float32, -lim2, lim2)

    out = mlp_forward(x, w1, b1, w2, b2)
    out = jax.block_until_ready(out)

    # Pure-JAX reference (matches PyTorch forward).
    ref = jax.nn.sigmoid(jnp.maximum(x @ w1.T + b1, 0.0) @ w2.T + b2)
    assert out.shape == (B, num_classes)
    assert jnp.allclose(out, ref, atol=1e-5, rtol=1e-5)

    print("KERNEL_OK")
</pallas_src>

<mosaic_0001>
module attributes {stable_mosaic.version = 11 : i64} {
  func.func @mlp_kernel(%arg0: i32, %arg1: memref<256x32xf32, #tpu.memory_space<vmem>>, %arg2: memref<64x32xf32, #tpu.memory_space<vmem>>, %arg3: memref<64x1xf32, #tpu.memory_space<vmem>>, %arg4: memref<64x1xf32, #tpu.memory_space<vmem>>, %arg5: memref<1x1xf32, #tpu.memory_space<smem>>, %arg6: memref<1x256xf32, #tpu.memory_space<vmem>>) attributes {dimension_semantics = [#tpu.dimension_semantics<parallel>], iteration_bounds = array<i64: 2>, scalar_prefetch = 0 : i64, scratch_operands = 0 : i64, tpu.core_type = #tpu.core_type<tc>, window_params = [{transform_indices = @transform_0, window_bounds = array<i64: 256, 32>}, {pipeline_mode = #tpu.pipeline_mode<synchronous>, transform_indices = @transform_1, window_bounds = array<i64: 64, 32>}, {pipeline_mode = #tpu.pipeline_mode<synchronous>, transform_indices = @transform_2, window_bounds = array<i64: 64, 1>}, {pipeline_mode = #tpu.pipeline_mode<synchronous>, transform_indices = @transform_3, window_bounds = array<i64: 64, 1>}, {transform_indices = @transform_4, window_bounds = array<i64: 1, 1>}, {transform_indices = @transform_5, window_bounds = array<i64: 1, 256>}]} {
    %c0 = arith.constant 0 : index
    %c0_0 = arith.constant 0 : index
    %0 = vector.load %arg1[%c0, %c0_0] : memref<256x32xf32, #tpu.memory_space<vmem>>, vector<256x32xf32>
    %c0_1 = arith.constant 0 : index
    %c0_2 = arith.constant 0 : index
    %1 = vector.load %arg2[%c0_1, %c0_2] : memref<64x32xf32, #tpu.memory_space<vmem>>, vector<64x32xf32>
    %cst = arith.constant dense<0.000000e+00> : vector<64x256xf32>
    %2 = tpu.matmul %1, %0, %cst {dimension_numbers = #tpu.dot_dimension_numbers<[1], [1], [0], [0], [0, 0, 1, 0], [], []>} : vector<64x32xf32>, vector<256x32xf32>, vector<64x256xf32> -> vector<64x256xf32>
    %c0_3 = arith.constant 0 : index
    %c0_4 = arith.constant 0 : index
    %3 = vector.load %arg3[%c0_3, %c0_4] : memref<64x1xf32, #tpu.memory_space<vmem>>, vector<64x1xf32>
    %4 = vector.broadcast %3 : vector<64x1xf32> to vector<64x256xf32>
    %5 = arith.addf %2, %4 : vector<64x256xf32>
    %cst_5 = arith.constant 0.000000e+00 : f32
    %6 = vector.broadcast %cst_5 : f32 to vector<64x256xf32>
    %7 = arith.maximumf %5, %6 : vector<64x256xf32>
    %c0_6 = arith.constant 0 : index
    %c0_7 = arith.constant 0 : index
    %8 = vector.load %arg4[%c0_6, %c0_7] : memref<64x1xf32, #tpu.memory_space<vmem>>, vector<64x1xf32>
    %9 = vector.broadcast %8 : vector<64x1xf32> to vector<64x256xf32>
    %10 = arith.mulf %7, %9 : vector<64x256xf32>
    %cst_8 = arith.constant dense<0.000000e+00> : vector<256xf32>
    %11 = vector.multi_reduction <add>, %10, %cst_8 [0] : vector<64x256xf32> to vector<256xf32>
    %12 = vector.shape_cast %11 : vector<256xf32> to vector<1x256xf32>
    %c0_9 = arith.constant 0 : index
    %c0_10 = arith.constant 0 : index
    %13 = memref.load %arg5[%c0_9, %c0_10] : memref<1x1xf32, #tpu.memory_space<smem>>
    %14 = vector.broadcast %13 : f32 to vector<1x256xf32>
    %15 = arith.addf %12, %14 : vector<1x256xf32>
    %16 = arith.negf %15 : vector<1x256xf32>
    %17 = math.exp %16 : vector<1x256xf32>
    %cst_11 = arith.constant 1.000000e+00 : f32
    %18 = vector.broadcast %cst_11 : f32 to vector<1x256xf32>
    %19 = arith.addf %18, %17 : vector<1x256xf32>
    %20 = arith.divf %18, %19 : vector<1x256xf32>
    %c0_12 = arith.constant 0 : index
    %c0_13 = arith.constant 0 : index
    %21 = vector.load %arg6[%c0_12, %c0_13] : memref<1x256xf32, #tpu.memory_space<vmem>>, vector<1x256xf32>
    tpu.vector_store %arg6[%c0_12, %c0_13], %20 {strides = array<i32>} : memref<1x256xf32, #tpu.memory_space<vmem>>, vector<1x256xf32>,
    return
  }
  func.func @transform_0(%arg0: i32) -> (i32, i32) {
    %c0_i32 = arith.constant 0 : i32
    %c0_i32_0 = arith.constant 0 : i32
    return %arg0, %c0_i32 : i32, i32
  }
  func.func @transform_1(%arg0: i32) -> (i32, i32) {
    %c0_i32 = arith.constant 0 : i32
    %c0_i32_0 = arith.constant 0 : i32
    %c0_i32_1 = arith.constant 0 : i32
    return %c0_i32, %c0_i32_0 : i32, i32
  }
  func.func @transform_2(%arg0: i32) -> (i32, i32) {
    %c0_i32 = arith.constant 0 : i32
    %c0_i32_0 = arith.constant 0 : i32
    %c0_i32_1 = arith.constant 0 : i32
    return %c0_i32, %c0_i32_0 : i32, i32
  }
  func.func @transform_3(%arg0: i32) -> (i32, i32) {
    %c0_i32 = arith.constant 0 : i32
    %c0_i32_0 = arith.constant 0 : i32
    %c0_i32_1 = arith.constant 0 : i32
    return %c0_i32, %c0_i32_0 : i32, i32
  }
  func.func @transform_4(%arg0: i32) -> (i32, i32) {
    %c0_i32 = arith.constant 0 : i32
    %c0_i32_0 = arith.constant 0 : i32
    %c0_i32_1 = arith.constant 0 : i32
    return %c0_i32, %c0_i32_0 : i32, i32
  }
  func.func @transform_5(%arg0: i32) -> (i32, i32) {
    %c0_i32 = arith.constant 0 : i32
    %c0_i32_0 = arith.constant 0 : i32
    return %c0_i32, %arg0 : i32, i32
  }
}

</mosaic_0001>

<llo_original>
// kernel: tpu_custom_call.1
$region0: #{tpu_custom_call.1}
  #allocation0 [shape = 'u32[]', space=smem, size = 0x4, offset = 0x4, fixed_abs, tag = 'smem constant byte address 0x4 - core index']
  #allocation1 [shape = 'u32[144,128]{1,0:T(1,128)}', space=vmem, size = 0x12000, scoped, tag = 'internal scratch']
  #allocation2 [shape = 'f32[1,1]{1,0:T(1,128)S(6)}', space=smem, size = 0x200, scoped, tag = 'scoped memory for tpu_custom_call.1']
  %s0 = inlined_call_operand.vmem [shape: f32[300,32], index: 0, kind: input, shape index: {}]
  %s1 = inlined_call_operand.vmem [shape: f32[64,32], index: 1, kind: input, shape index: {}]
  %s2 = inlined_call_operand.vmem [shape: f32[64,1], index: 2, kind: input, shape index: {}]
  %s3 = inlined_call_operand.vmem [shape: f32[64,1], index: 3, kind: input, shape index: {}]
  %s4 = inlined_call_operand.<no memory space> [shape: f32[1,1], index: 4, kind: input, shape index: {}]
  %s5 = inlined_call_operand.hbm [shape: f32[1,300], index: 5, kind: output, shape index: {}]
  %s6 = sld [smem:[#allocation0]]
  $region53: #{tpu_custom_call.1} parent=0
    _
  %s8 = ssub.s32 1, %s6
  %s9 = scalar_select 0, %s8, %s6
  %10 = sst [smem:[#allocation2]] %s4
  $region1: #{tpu_custom_call.1} parent=0
    #allocation3 [shape = 'u8[2048]{0}', space=vmem, size = 0x800, scoped, tag = 'output window, operand 0']
    #allocation4 [shape = 's32[2]{0}', space=sflag, size = 0x8, scoped, tag = 'scoped memory for tpu_custom_call.1']
    %11 = vsyncpa [#allocation4], 0
    %s12 = scalar_lea.sflag [#allocation4], 1
    %13 = vsyncpa %s12, 0
    loop: start=0, step=1, limit=4
    $region2: #{tpu_custom_call.1} parent=1 // loop_pre_header
      _
    $region3: #{tpu_custom_call.1} parent=1 // loop_header
      %s15 = sphi 0, %s19
      %p16 = scmp.ge.s32.totalorder %s15, 4
      %s25 = sphi 0, %s27
      %s28 = sphi 0, %s25
      %s29 = sphi 0, %s28
      %s45 = sphi 0, %s29
      %s49 = sphi 0, %s49
      %s51 = sphi 0, %s49
      %s52 = sphi 0, %s51
      %s66 = sphi 0, %s52
      %s70 = sphi 0, %s70
      %s72 = sphi 0, %s70
      %s73 = sphi 0, %s72
      %s87 = sphi 0, %s73
      %s91 = sphi 0, %s91
      %s93 = sphi 0, %s91
      %s94 = sphi 0, %s93
      %s108 = sphi 0, %s94
      %s112 = sphi 0, %s112
      %s114 = sphi 0, %s112
      %s115 = sphi 0, %s114
      %s129 = sphi 0, %s115
      %s135 = sphi 0, %s137
      %s138 = sphi 0, %s135
      %s139 = sphi 0, %s138
      %s155 = sphi 0, %s139
    $region4: #{tpu_custom_call.1} parent=1 // loop_header_branch
      %18 = sbr.rel (%p16) target = $region8
    $region5: #{tpu_custom_call.1} parent=1 // loop_body
      %s20 = ssub.s32 %s15, 1
      %s21 = ssub.s32 %s15, 2
      %s22 = sadd.s32 %s15, 1
      %s23 = ssub.s32 %s15, %s22
      %p24 = scmp.eq.s32.totalorder %s23, 0
      %s26 = sadd.s32 %s25, 1
      %s27 = scalar_select %p24, %s25, %s26
      %p30 = pneg %p24
      %p31 = scmp.eq.s32.totalorder %s15, 1
      %p32 = por %p30, %p31
      %p33 = scmp.ne.s32.totalorder %s25, %s28
      %p34 = scmp.eq.s32.totalorder %s15, 0
      %p35 = por %p33, %p34
      %p36 = scmp.ne.s32.totalorder %s25, %s28
      %p37 = scmp.eq.s32.totalorder %s20, 1
      %p38 = por %p36, %p37
      %p39 = scmp.ne.s32.totalorder %s28, %s29
      %p40 = scmp.eq.s32.totalorder %s20, 0
      %p41 = por %p39, %p40
      %p42 = scmp.ne.s32.totalorder %s28, %s29
      %p43 = scmp.eq.s32.totalorder %s21, 1
      %p44 = por %p42, %p43
      %p46 = scmp.ne.s32.totalorder %s29, %s45
      %p47 = scmp.eq.s32.totalorder %s21, 0
      %p48 = por %p46, %p47
      %s50 = sadd.s32 %s49, 1
      %p53 = scmp.eq.s32.totalorder %s15, 1
      %p54 = scmp.ne.s32.totalorder %s49, %s51
      %p55 = scmp.eq.s32.totalorder %s15, 0
      %p56 = por %p54, %p55
      %p57 = scmp.ne.s32.totalorder %s49, %s51
      %p58 = scmp.eq.s32.totalorder %s20, 1
      %p59 = por %p57, %p58
      %p60 = scmp.ne.s32.totalorder %s51, %s52
      %p61 = scmp.eq.s32.totalorder %s20, 0
      %p62 = por %p60, %p61
      %p63 = scmp.ne.s32.totalorder %s51, %s52
      %p64 = scmp.eq.s32.totalorder %s21, 1
      %p65 = por %p63, %p64
      %p67 = scmp.ne.s32.totalorder %s52, %s66
      %p68 = scmp.eq.s32.totalorder %s21, 0
      %p69 = por %p67, %p68
      %s71 = sadd.s32 %s70, 1
      %p74 = scmp.eq.s32.totalorder %s15, 1
      %p75 = scmp.ne.s32.totalorder %s70, %s72
      %p76 = scmp.eq.s32.totalorder %s15, 0
      %p77 = por %p75, %p76
      %p78 = scmp.ne.s32.totalorder %s70, %s72
      %p79 = scmp.eq.s32.totalorder %s20, 1
      %p80 = por %p78, %p79
      %p81 = scmp.ne.s32.totalorder %s72, %s73
      %p82 = scmp.eq.s32.totalorder %s20, 0
      %p83 = por %p81, %p82
      %p84 = scmp.ne.s32.totalorder %s72, %s73
      %p85 = scmp.eq.s32.totalorder %s21, 1
      %p86 = por %p84, %p85
      %p88 = scmp.ne.s32.totalorder %s73, %s87
      %p89 = scmp.eq.s32.totalorder %s21, 0
      %p90 = por %p88, %p89
      %s92 = sadd.s32 %s91, 1
      %p95 = scmp.eq.s32.totalorder %s15, 1
      %p96 = scmp.ne.s32.totalorder %s91, %s93
      %p97 = scmp.eq.s32.totalorder %s15, 0
      %p98 = por %p96, %p97
      %p99 = scmp.ne.s32.totalorder %s91, %s93
      %p100 = scmp.eq.s32.totalorder %s20, 1
      %p101 = por %p99, %p100
      %p102 = scmp.ne.s32.totalorder %s93, %s94
      %p103 = scmp.eq.s32.totalorder %s20, 0
      %p104 = por %p102, %p103
      %p105 = scmp.ne.s32.totalorder %s93, %s94
      %p106 = scmp.eq.s32.totalorder %s21, 1
      %p107 = por %p105, %p106
      %p109 = scmp.ne.s32.totalorder %s94, %s108
      %p110 = scmp.eq.s32.totalorder %s21, 0
      %p111 = por %p109, %p110
      %s113 = sadd.s32 %s112, 1
      %p116 = scmp.eq.s32.totalorder %s15, 1
      %p117 = scmp.ne.s32.totalorder %s112, %s114
      %p118 = scmp.eq.s32.totalorder %s15, 0
      %p119 = por %p117, %p118
      %p120 = scmp.ne.s32.totalorder %s112, %s114
      %p121 = scmp.eq.s32.totalorder %s20, 1
      %p122 = por %p120, %p121
      %p123 = scmp.ne.s32.totalorder %s114, %s115
      %p124 = scmp.eq.s32.totalorder %s20, 0
      %p125 = por %p123, %p124
      %p126 = scmp.ne.s32.totalorder %s114, %s115
      %p127 = scmp.eq.s32.totalorder %s21, 1
      %p128 = por %p126, %p127
      %p130 = scmp.ne.s32.totalorder %s115, %s129
      %p131 = scmp.eq.s32.totalorder %s21, 0
      %p132 = por %p130, %p131
      %s133 = ssub.s32 %s15, %s22
      %p134 = scmp.eq.s32.totalorder %s133, 0
      %s136 = sadd.s32 %s135, 1
      %s137 = scalar_select %p134, %s135, %s136
      %p140 = pneg %p134
      %p141 = scmp.eq.s32.totalorder %s15, 1
      %p142 = por %p140, %p141
      %p143 = scmp.ne.s32.totalorder %s135, %s138
      %p144 = scmp.eq.s32.totalorder %s15, 0
      %p145 = por %p143, %p144
      %p146 = scmp.ne.s32.totalorder %s135, %s138
      %p147 = scmp.eq.s32.totalorder %s20, 1
      %p148 = por %p146, %p147
      %p149 = scmp.ne.s32.totalorder %s138, %s139
      %p150 = scmp.eq.s32.totalorder %s20, 0
      %p151 = por %p149, %p150
      %p152 = scmp.ne.s32.totalorder %s138, %s139
      %p153 = scmp.eq.s32.totalorder %s21, 1
      %p154 = por %p152, %p153
      %p156 = scmp.ne.s32.totalorder %s139, %s155
      %p157 = scmp.eq.s32.totalorder %s21, 0
      %p158 = por %p156, %p157
      %p159 = scmp.le.s32.totalorder 1, %s15
      %p160 = scmp.lt.s32.totalorder %s15, 3
      %p161 = pnand %p159, %p160
      %p162 = pneg %p161
      // Predicated region
      $region9: #{tpu_custom_call.1} parent=5 // pred_check
        _
      $region10: #{tpu_custom_call.1} parent=5 // pred_check_branch
        %164 = sbr.rel (%p161) target = $region12
      $region11: #{tpu_custom_call.1} parent=5 // pred_region
        %s165 = ssub.s32 %s15, 1
        // Predicated region
        $region13: #{tpu_custom_call.1} parent=11 // pred_check
          %p166 = pneg %p62
        $region14: #{tpu_custom_call.1} parent=11 // pred_check_branch
          %168 = sbr.rel (%p166) target = $region16
        $region15: #{tpu_custom_call.1} parent=11 // pred_region
          _
        $region16: #{tpu_custom_call.1} parent=11 // pred_fallthru
          _
        // Predicated region
        $region17: #{tpu_custom_call.1} parent=11 // pred_check
          %p169 = pneg %p83
        $region18: #{tpu_custom_call.1} parent=11 // pred_check_branch
          %171 = sbr.rel (%p169) target = $region20
        $region19: #{tpu_custom_call.1} parent=11 // pred_region
          _
        $region20: #{tpu_custom_call.1} parent=11 // pred_fallthru
          _
        // Predicated region
        $region21: #{tpu_custom_call.1} parent=11 // pred_check
          %p172 = pneg %p104
        $region22: #{tpu_custom_call.1} parent=11 // pred_check_branch
          %174 = sbr.rel (%p172) target = $region24
        $region23: #{tpu_custom_call.1} parent=11 // pred_region
          _
        $region24: #{tpu_custom_call.1} parent=11 // pred_fallthru
          _
        // Predicated region
        $region25: #{tpu_custom_call.1} parent=11 // pred_check
          %p175 = pneg %p125
        $region26: #{tpu_custom_call.1} parent=11 // pred_check_branch
          %177 = sbr.rel (%p175) target = $region28
        $region27: #{tpu_custom_call.1} parent=11 // pred_region
          _
        $region28: #{tpu_custom_call.1} parent=11 // pred_fallthru
          _
      $region12: #{tpu_custom_call.1} parent=5 // pred_fallthru
        _
      %p178 = scmp.lt.s32.totalorder %s15, 2
      // Predicated region
      $region29: #{tpu_custom_call.1} parent=5 // pred_check
        %p179 = pneg %p178
      $region30: #{tpu_custom_call.1} parent=5 // pred_check_branch
        %181 = sbr.rel (%p179) target = $region32
      $region31: #{tpu_custom_call.1} parent=5 // pred_region
        // Predicated region
        $region33: #{tpu_custom_call.1} parent=31 // pred_check
          %p182 = pneg %p35
        $region34: #{tpu_custom_call.1} parent=31 // pred_check_branch
          %184 = sbr.rel (%p182) target = $region36
        $region35: #{tpu_custom_call.1} parent=31 // pred_region
          %s185 = smul.u32 32, %s15
          %s186 = ssub.s32 38, %s185
          %p187 = scmp.lt.s32.totalorder %s186, 32
          %s188 = scalar_select %p187, %s186, 32
          %s189 = smul.u32 128, %s188
          %p190 = scmp.lt.s32.totalorder %s185, 37
          %s191 = scalar_select %p190, %s185, 37
          %s192 = smul.addr %s191, 8
          %s193 = scalar_lea.vmem %s0, %s192
          %s194 = smul.u32 32, %s15
          %s195 = ssub.s32 38, %s194
          %p196 = scmp.lt.s32.totalorder %s195, 32
          %s197 = scalar_select %p196, %s195, 32
          %s198 = smul.u32 128, %s197
        $region36: #{tpu_custom_call.1} parent=31 // pred_fallthru
          _
      $region32: #{tpu_custom_call.1} parent=5 // pred_fallthru
        _
      %p199 = scmp.le.s32.totalorder 1, %s15
      %p200 = scmp.lt.s32.totalorder %s15, 3
      %p201 = pnand %p199, %p200
      %p202 = pneg %p201
      // Predicated region
      $region37: #{tpu_custom_call.1} parent=5 // pred_check
        _
      $region38: #{tpu_custom_call.1} parent=5 // pred_check_branch
        %204 = sbr.rel (%p201) target = $region40
      $region39: #{tpu_custom_call.1} parent=5 // pred_region
        %s205 = ssub.s32 %s15, 1
        %s206 = smul.u32 32, %s20
        %s207 = ssub.s32 38, %s206
        %p208 = scmp.lt.s32.totalorder %s207, 32
        %s209 = scalar_select %p208, %s207, 32
        %s210 = smul.u32 128, %s209
        %p211 = scmp.lt.s32.totalorder %s206, 37
        %s212 = scalar_select %p211, %s206, 37
        %s213 = smul.addr %s212, 8
        %s214 = scalar_lea.vmem %s0, %s213
        %p215 = pneg %p41
        %p216 = pneg %p38
        %p217 = pneg %p62
        %p218 = pneg %p59
        %p219 = pneg %p83
        %p220 = pneg %p80
        %p221 = pneg %p104
        %p222 = pneg %p101
        %p223 = pneg %p125
        %p224 = pneg %p122
        %p225 = pneg %p151
        %p226 = pneg %p148
        %s227 = sand.u32 %s138, 1
        %s228 = scalar_lea.sflag [#allocation4], %s227
        %s229 = sand.u32 %s138, 1
        %s230 = smul.addr %s229, 2
        %s231 = scalar_lea.vmem [#allocation3], %s230
        %s232 = smul.u32 32, %s20
        %s233 = ssub.s32 38, %s232
        %p234 = scmp.lt.s32.totalorder %s233, 32
        %s235 = scalar_select %p234, %s233, 32
        %s236 = smul.u32 128, %s235
        %p237 = scmp.lt.s32.totalorder %s232, 37
        %s238 = scalar_select %p237, %s232, 37
        %s239 = smul.addr %s238, 8
        %s240 = scalar_lea.vmem %s0, %s239
        %s241 = smul.u32 32, %s20
        %s242 = ssub.s32 38, %s241
        %p243 = scmp.lt.s32.totalorder %s242, 32
        %s244 = scalar_select %p243, %s242, 32
        %s245 = smul.u32 128, %s244
        %s246 = smul.u32 2, %s20
        %s247 = ssub.s32 3, %s246
        %p248 = scmp.lt.s32.totalorder %s247, 2
        %s249 = scalar_select %p248, %s247, 2
        %s250 = smul.u32 16, %s249
        %v251 = vld [vmem:[%s240] sm:$0xff]
        %v252 = vld [vmem:[%s240 + $0x8] sm:$0xff]
        %v253 = vld [vmem:[%s240 + $0x10] sm:$0xff]
        %v254 = vld [vmem:[%s240 + $0x18] sm:$0xff]
        %v255 = vld [vmem:[%s240 + $0x20] sm:$0xff]
        %v256 = vld [vmem:[%s240 + $0x28] sm:$0xff]
        %v257 = vld [vmem:[%s240 + $0x30] sm:$0xff]
        %v258 = vld [vmem:[%s240 + $0x38] sm:$0xff]
        %v259 = vld [vmem:[%s240 + $0x40] sm:$0xff]
        %v260 = vld [vmem:[%s240 + $0x48] sm:$0xff]
        %v261 = vld [vmem:[%s240 + $0x50] sm:$0xff]
        %v262 = vld [vmem:[%s240 + $0x58] sm:$0xff]
        %v263 = vld [vmem:[%s240 + $0x60] sm:$0xff]
        %v264 = vld [vmem:[%s240 + $0x68] sm:$0xff]
        %v265 = vld [vmem:[%s240 + $0x70] sm:$0xff]
        %v266 = vld [vmem:[%s240 + $0x78] sm:$0xff]
        %v267 = vld [vmem:[%s240 + $0x80] sm:$0xff]
        %v268 = vld [vmem:[%s240 + $0x88] sm:$0xff]
        %v269 = vld [vmem:[%s240 + $0x90] sm:$0xff]
        %v270 = vld [vmem:[%s240 + $0x98] sm:$0xff]
        %v271 = vld [vmem:[%s240 + $0xa0] sm:$0xff]
        %v272 = vld [vmem:[%s240 + $0xa8] sm:$0xff]
        %v273 = vld [vmem:[%s240 + $0xb0] sm:$0xff]
        %v274 = vld [vmem:[%s240 + $0xb8] sm:$0xff]
        %v275 = vld [vmem:[%s240 + $0xc0] sm:$0xff]
        %v276 = vld [vmem:[%s240 + $0xc8] sm:$0xff]
        %v277 = vld [vmem:[%s240 + $0xd0] sm:$0xff]
        %v278 = vld [vmem:[%s240 + $0xd8] sm:$0xff]
        %v279 = vld [vmem:[%s240 + $0xe0] sm:$0xff]
        %v280 = vld [vmem:[%s240 + $0xe8] sm:$0xff]
        %v281 = vld [vmem:[%s240 + $0xf0] sm:$0xff]
        %v282 = vld [vmem:[%s240 + $0xf8] sm:$0xff]
        %v283 = vld [vmem:[%s1] sm:$0xff]
        %v284 = vld [vmem:[%s1 + $0x8] sm:$0xff]
        %v285 = vld [vmem:[%s1 + $0x10] sm:$0xff]
        %v286 = vld [vmem:[%s1 + $0x18] sm:$0xff]
        %v287 = vld [vmem:[%s1 + $0x20] sm:$0xff]
        %v288 = vld [vmem:[%s1 + $0x28] sm:$0xff]
        %v289 = vld [vmem:[%s1 + $0x30] sm:$0xff]
        %v290 = vld [vmem:[%s1 + $0x38] sm:$0xff]
        %v291 = vld [vmem:[%s2] sm:$0xff]
        %v292 = vld [vmem:[%s2 + $0x8] sm:$0xff]
        %v293 = vld [vmem:[%s2 + $0x10] sm:$0xff]
        %v294 = vld [vmem:[%s2 + $0x18] sm:$0xff]
        %v295 = vld [vmem:[%s2 + $0x20] sm:$0xff]
        %v296 = vld [vmem:[%s2 + $0x28] sm:$0xff]
        %v297 = vld [vmem:[%s2 + $0x30] sm:$0xff]
        %v298 = vld [vmem:[%s2 + $0x38] sm:$0xff]
        %300 = vset.pattern.permute.xlu0 0
        %301 = vperm.xlu0 %300, %v291
        %v302 = vpop.permute.xlu0 %301
        %305 = vset.pattern.permute.xlu0 0
        %306 = vperm.xlu0 %305, %v292
        %v307 = vpop.permute.xlu0 %306
        %310 = vset.pattern.permute.xlu0 0
        %311 = vperm.xlu0 %310, %v293
        %v312 = vpop.permute.xlu0 %311
        %315 = vset.pattern.permute.xlu0 0
        %316 = vperm.xlu0 %315, %v294
        %v317 = vpop.permute.xlu0 %316
        %320 = vset.pattern.permute.xlu0 0
        %321 = vperm.xlu0 %320, %v295
        %v322 = vpop.permute.xlu0 %321
        %325 = vset.pattern.permute.xlu0 0
        %326 = vperm.xlu0 %325, %v296
        %v327 = vpop.permute.xlu0 %326
        %330 = vset.pattern.permute.xlu0 0
        %331 = vperm.xlu0 %330, %v297
        %v332 = vpop.permute.xlu0 %331
        %335 = vset.pattern.permute.xlu0 0
        %336 = vperm.xlu0 %335, %v298
        %v337 = vpop.permute.xlu0 %336
        %vm339 = vcmask 261120
        %v341 = vsel %vm339, %v283, 0
        %v344 = vsel %vm339, %v284, 0
        %v347 = vsel %vm339, %v285, 0
        %v350 = vsel %vm339, %v286, 0
        %v353 = vsel %vm339, %v287, 0
        %v356 = vsel %vm339, %v288, 0
        %v359 = vsel %vm339, %v289, 0
        %v362 = vsel %vm339, %v290, 0
        %v365 = vsel %vm339, %v251, 0
        %v368 = vsel %vm339, %v252, 0
        %v371 = vsel %vm339, %v253, 0
        %v374 = vsel %vm339, %v254, 0
        %v377 = vsel %vm339, %v255, 0
        %v380 = vsel %vm339, %v256, 0
        %v383 = vsel %vm339, %v257, 0
        %v386 = vsel %vm339, %v258, 0
        %v389 = vsel %vm339, %v259, 0
        %v392 = vsel %vm339, %v260, 0
        %v395 = vsel %vm339, %v261, 0
        %v398 = vsel %vm339, %v262, 0
        %v401 = vsel %vm339, %v263, 0
        %v404 = vsel %vm339, %v264, 0
        %v407 = vsel %vm339, %v265, 0
        %v410 = vsel %vm339, %v266, 0
        %v413 = vsel %vm339, %v267, 0
        %v416 = vsel %vm339, %v268, 0
        %v419 = vsel %vm339, %v269, 0
        %v422 = vsel %vm339, %v270, 0
        %v425 = vsel %vm339, %v271, 0
        %v428 = vsel %vm339, %v272, 0
        %v431 = vsel %vm339, %v273, 0
        %v434 = vsel %vm339, %v274, 0
        %v437 = vsel %vm339, %v275, 0
        %v440 = vsel %vm339, %v276, 0
        %v443 = vsel %vm339, %v277, 0
        %v446 = vsel %vm339, %v278, 0
        %v449 = vsel %vm339, %v279, 0
        %v452 = vsel %vm339, %v280, 0
        %v455 = vsel %vm339, %v281, 0
        %v458 = vsel %vm339, %v282, 0
        %460 = vmatprep.subr.mxu0 0.0
        %461 = vmatpush1.xpose.msra.mxu0 %v365
        %462 = vmatprep.subr.mxu0 0.0
        %463 = vmatpush1.xpose.msra.mxu0 %v368
        %464 = vmatprep.subr.mxu0 0.0
        %465 = vmatpush1.xpose.msra.mxu0 %v371
        %466 = vmatprep.subr.mxu0 0.0
        %467 = vmatpush1.xpose.msra.mxu0 %v374
        %468 = vmatprep.subr.mxu0 0.0
        %469 = vmatpush1.xpose.msra.mxu0 %v377
        %470 = vmatprep.subr.mxu0 0.0
        %471 = vmatpush1.xpose.msra.mxu0 %v380
        %472 = vmatprep.subr.mxu0 0.0
        %473 = vmatpush1.xpose.msra.mxu0 %v383
        %474 = vmatprep.subr.mxu0 0.0
        %475 = vmatpush1.xpose.msra.mxu0 %v386
        %476 = vmatprep.subr.mxu0 0.0
        %477 = vmatpush1.xpose.msra.mxu0 %v389
        %478 = vmatprep.subr.mxu0 0.0
        %479 = vmatpush1.xpose.msra.mxu0 %v392
        %480 = vmatprep.subr.mxu0 0.0
        %481 = vmatpush1.xpose.msra.mxu0 %v395
        %482 = vmatprep.subr.mxu0 0.0
        %483 = vmatpush1.xpose.msra.mxu0 %v398
        %484 = vmatprep.subr.mxu0 0.0
        %485 = vmatpush1.xpose.msra.mxu0 %v401
        %486 = vmatprep.subr.mxu0 0.0
        %487 = vmatpush1.xpose.msra.mxu0 %v404
        %488 = vmatprep.subr.mxu0 0.0
        %489 = vmatpush1.xpose.msra.mxu0 %v407
        %490 = vmatprep.subr.mxu0 0.0
        %491 = vmatpush1.xpose.msra.mxu0 %v410
        %492 = vmatprep.subr.mxu0 0.0
        %493 = vmatpush1.xpose.msra.mxu0 %v413
        %494 = vmatprep.subr.mxu0 0.0
        %495 = vmatpush1.xpose.msra.mxu0 %v416
        %496 = vmatprep.subr.mxu0 0.0
        %497 = vmatpush1.xpose.msra.mxu0 %v419
        %498 = vmatprep.subr.mxu0 0.0
        %499 = vmatpush1.xpose.msra.mxu0 %v422
        %500 = vmatprep.subr.mxu0 0.0
        %501 = vmatpush1.xpose.msra.mxu0 %v425
        %502 = vmatprep.subr.mxu0 0.0
        %503 = vmatpush1.xpose.msra.mxu0 %v428
        %504 = vmatprep.subr.mxu0 0.0
        %505 = vmatpush1.xpose.msra.mxu0 %v431
        %506 = vmatprep.subr.mxu0 0.0
        %507 = vmatpush1.xpose.msra.mxu0 %v434
        %508 = vmatprep.subr.mxu0 0.0
        %509 = vmatpush1.xpose.msra.mxu0 %v437
        %510 = vmatprep.subr.mxu0 0.0
        %511 = vmatpush1.xpose.msra.mxu0 %v440
        %512 = vmatprep.subr.mxu0 0.0
        %513 = vmatpush1.xpose.msra.mxu0 %v443
        %514 = vmatprep.subr.mxu0 0.0
        %515 = vmatpush1.xpose.msra.mxu0 %v446
        %516 = vmatprep.subr.mxu0 0.0
        %517 = vmatpush1.xpose.msra.mxu0 %v449
        %518 = vmatprep.subr.mxu0 0.0
        %519 = vmatpush1.xpose.msra.mxu0 %v452
        %520 = vmatprep.subr.mxu0 0.0
        %521 = vmatpush1.xpose.msra.mxu0 %v455
        %522 = vmatprep.subr.mxu0 0.0
        %523 = vmatpush1.xpose.msra.mxu0 %v458
        %524 = vmatprep.mubr.f32.mxu0 0.0
        %525 = vmatmul.mubr.f32.gmra.mrb[0].mxu0 %v341
        %v526 = vpop.f32.mrb[0].mxu0
        %v527 = vadd.f32 %v302, %v526
        %v528 = vpop.f32.mrb[0].mxu0
        %v529 = vadd.f32 %v302, %v528
        %530 = vmatprep.mubr.f32.mxu0 0.0
        %531 = vmatmul.mubr.f32.gmra.mrb[0].mxu0 %v344
        %v532 = vpop.f32.mrb[0].mxu0
        %v533 = vadd.f32 %v307, %v532
        %v534 = vpop.f32.mrb[0].mxu0
        %v535 = vadd.f32 %v307, %v534
        %536 = vmatprep.mubr.f32.mxu0 0.0
        %537 = vmatmul.mubr.f32.gmra.mrb[0].mxu0 %v347
        %v538 = vpop.f32.mrb[0].mxu0
        %v539 = vadd.f32 %v312, %v538
        %v540 = vpop.f32.mrb[0].mxu0
        %v541 = vadd.f32 %v312, %v540
        %542 = vmatprep.mubr.f32.mxu0 0.0
        %543 = vmatmul.mubr.f32.gmra.mrb[0].mxu0 %v350
        %v544 = vpop.f32.mrb[0].mxu0
        %v545 = vadd.f32 %v317, %v544
        %v546 = vpop.f32.mrb[0].mxu0
        %v547 = vadd.f32 %v317, %v546
        %548 = vmatprep.mubr.f32.mxu0 0.0
        %549 = vmatmul.mubr.f32.gmra.mrb[0].mxu0 %v353
        %v550 = vpop.f32.mrb[0].mxu0
        %v551 = vadd.f32 %v322, %v550
        %v552 = vpop.f32.mrb[0].mxu0
        %v553 = vadd.f32 %v322, %v552
        %554 = vmatprep.mubr.f32.mxu0 0.0
        %555 = vmatmul.mubr.f32.gmra.mrb[0].mxu0 %v356
        %v556 = vpop.f32.mrb[0].mxu0
        %v557 = vadd.f32 %v327, %v556
        %v558 = vpop.f32.mrb[0].mxu0
        %v559 = vadd.f32 %v327, %v558
        %560 = vmatprep.mubr.f32.mxu0 0.0
        %561 = vmatmul.mubr.f32.gmra.mrb[0].mxu0 %v359
        %v562 = vpop.f32.mrb[0].mxu0
        %v563 = vadd.f32 %v332, %v562
        %v564 = vpop.f32.mrb[0].mxu0
        %v565 = vadd.f32 %v332, %v564
        %566 = vmatprep.mubr.f32.mxu0 0.0
        %567 = vmatmul.mubr.f32.gmra.mrb[0].mxu0 %v362
        %v568 = vpop.f32.mrb[0].mxu0
        %v569 = vadd.f32 %v337, %v568
        %v570 = vpop.f32.mrb[0].mxu0
        %v571 = vadd.f32 %v337, %v570
        %572 = vdwg.mxu0
        %v573 = vmax.f32 %v527, 0.0
        %v574 = vmax.f32 %v529, 0.0
        %v575 = vmax.f32 %v533, 0.0
        %v576 = vmax.f32 %v535, 0.0
        %v577 = vmax.f32 %v539, 0.0
        %v578 = vmax.f32 %v541, 0.0
        %v579 = vmax.f32 %v545, 0.0
        %v580 = vmax.f32 %v547, 0.0
        %v581 = vmax.f32 %v551, 0.0
        %v582 = vmax.f32 %v553, 0.0
        %v583 = vmax.f32 %v557, 0.0
        %v584 = vmax.f32 %v559, 0.0
        %v585 = vmax.f32 %v563, 0.0
        %v586 = vmax.f32 %v565, 0.0
        %v587 = vmax.f32 %v569, 0.0
        %v588 = vmax.f32 %v571, 0.0
        %v589 = vld [vmem:[%s3] sm:$0xff]
        %v590 = vld [vmem:[%s3 + $0x8] sm:$0xff]
        %v591 = vld [vmem:[%s3 + $0x10] sm:$0xff]
        %v592 = vld [vmem:[%s3 + $0x18] sm:$0xff]
        %v593 = vld [vmem:[%s3 + $0x20] sm:$0xff]
        %v594 = vld [vmem:[%s3 + $0x28] sm:$0xff]
        %v595 = vld [vmem:[%s3 + $0x30] sm:$0xff]
        %v596 = vld [vmem:[%s3 + $0x38] sm:$0xff]
        %598 = vset.pattern.permute.xlu0 0
        %599 = vperm.xlu0 %598, %v589
        %v600 = vpop.permute.xlu0 %599
        %603 = vset.pattern.permute.xlu0 0
        %604 = vperm.xlu0 %603, %v590
        %v605 = vpop.permute.xlu0 %604
        %608 = vset.pattern.permute.xlu0 0
        %609 = vperm.xlu0 %608, %v591
        %v610 = vpop.permute.xlu0 %609
        %613 = vset.pattern.permute.xlu0 0
        %614 = vperm.xlu0 %613, %v592
        %v615 = vpop.permute.xlu0 %614
        %618 = vset.pattern.permute.xlu0 0
        %619 = vperm.xlu0 %618, %v593
        %v620 = vpop.permute.xlu0 %619
        %623 = vset.pattern.permute.xlu0 0
        %624 = vperm.xlu0 %623, %v594
        %v625 = vpop.permute.xlu0 %624
        %628 = vset.pattern.permute.xlu0 0
        %629 = vperm.xlu0 %628, %v595
        %v630 = vpop.permute.xlu0 %629
        %633 = vset.pattern.permute.xlu0 0
        %634 = vperm.xlu0 %633, %v596
        %v635 = vpop.permute.xlu0 %634
        %v637 = vmul.f32 %v573, %v600
        %v638 = vmul.f32 %v574, %v600
        %v639 = vmul.f32 %v575, %v605
        %v640 = vmul.f32 %v576, %v605
        %v641 = vmul.f32 %v577, %v610
        %v642 = vmul.f32 %v578, %v610
        %v643 = vmul.f32 %v579, %v615
        %v644 = vmul.f32 %v580, %v615
        %v645 = vmul.f32 %v581, %v620
        %v646 = vmul.f32 %v582, %v620
        %v647 = vmul.f32 %v583, %v625
        %v648 = vmul.f32 %v584, %v625
        %v649 = vmul.f32 %v585, %v630
        %v650 = vmul.f32 %v586, %v630
        %v651 = vmul.f32 %v587, %v635
        %v652 = vmul.f32 %v588, %v635
        %v653 = vadd.f32 %v637, %v639
        %v654 = vadd.f32 %v653, %v641
        %v655 = vadd.f32 %v654, %v643
        %v656 = vadd.f32 %v655, %v645
        %v657 = vadd.f32 %v656, %v647
        %v658 = vadd.f32 %v657, %v649
        %v659 = vadd.f32 %v658, %v651
        %v660 = vrot.slane %v659, 4
        %v661 = vadd.f32 %v659, %v660
        %v662 = vrot.slane %v661, 2
        %v663 = vadd.f32 %v661, %v662
        %v664 = vrot.slane %v663, 1
        %v665 = vadd.f32 %v663, %v664
        %v666 = vadd.f32 %v638, %v640
        %v667 = vadd.f32 %v666, %v642
        %v668 = vadd.f32 %v667, %v644
        %v669 = vadd.f32 %v668, %v646
        %v670 = vadd.f32 %v669, %v648
        %v671 = vadd.f32 %v670, %v650
        %v672 = vadd.f32 %v671, %v652
        %v673 = vrot.slane %v672, 4
        %v674 = vadd.f32 %v672, %v673
        %v675 = vrot.slane %v674, 2
        %v676 = vadd.f32 %v674, %v675
        %v677 = vrot.slane %v676, 1
        %v678 = vadd.f32 %v676, %v677
        %s679 = sld [smem:[#allocation2]]
        %v680 = vstv %s679
        %v681 = vadd.f32 %v665, %v680
        %v682 = vadd.f32 %v678, %v680
        %v683 = vxor.u32 %v681, 2147483648
        %v684 = vxor.u32 %v682, 2147483648
        %v685 = vmul.f32 %v683, 1.442695
        %v686 = vpow.pop %v685
        %v687 = vmul.f32 %v684, 1.442695
        %v688 = vpow.pop %v687
        %v689 = vadd.f32 %v686, 1.0
        %v690 = vadd.f32 %v688, 1.0
        %v691 = vrcp.pop %v689
        %v692 = vmul.f32 1.0, %v691
        %v693 = vrcp.pop %v690
        %v694 = vmul.f32 1.0, %v693
        %v697 = vcombine.low %v692, %v694
        %v699 = vunpack.c.l.s4 1966171168
        %v700 = vunpack.c.0.s8 %v699
        %v701 = vlaneseq
        %v702 = vshrl.u32 %v701, 7
        %v703 = vsub.s32 %v700, %v702
        %v704 = vrot.slane %v697, %v703
        %v706 = vunpack.c.l.s4 1966171168
        %v707 = vunpack.c.0.s8 %v706
        %v708 = vlaneseq
        %v709 = vshrl.u32 %v708, 7
        %v710 = vsub.s32 %v707, %v709
        %v711 = vrot.slane %v704, %v710
        %v713 = vlaneseq
        %vm714 = vcmp.ge.s32.totalorder %v713, 0
        %vm715 = vcmp.lt.s32.totalorder %v713, 256
        %vm716 = vmand %vm714, %vm715
        %717 = vst.msk [vmem:[%s231] sm:$0x3] %vm716, %v711
        %s718 = sand.u32 %s138, 1
        %s719 = scalar_lea.sflag [#allocation4], %s718
        %s720 = sand.u32 %s138, 1
        %s721 = smul.addr %s720, 2
        %s722 = scalar_lea.vmem [#allocation3], %s721
        // Predicated region
        $region41: #{tpu_custom_call.1} parent=39 // pred_check
          %p723 = pneg %p148
        $region42: #{tpu_custom_call.1} parent=39 // pred_check_branch
          %725 = sbr.rel (%p723) target = $region44
        $region43: #{tpu_custom_call.1} parent=39 // pred_region
          %s726 = smul.u32 2, %s20
          %s727 = ssub.s32 3, %s726
          %p728 = scmp.lt.s32.totalorder %s727, 2
          %s729 = scalar_select %p728, %s727, 2
          %s730 = smul.u32 16, %s729
          %s732 = ssub.s32 32, %s730
          %733 = vsyncadd %s719, %s732
          %p734 = scmp.ne.s32.totalorder 0, %s730
          %s735 = smul.addr %s726, 16
          %s736 = scalar_lea.hbm %s5, %s735
          %s737 = sshll.u32 %s729, 4
          %s738 = sshll.u32 %s722, 4
          %s739 = int_to_ptr.vmem [resolvable:$true] %s738
          %741 = dma.vmem_to_hbm [thread:$0]  (%p734), %s739, %s737, %s736, %s719
        $region44: #{tpu_custom_call.1} parent=39 // pred_fallthru
          _
      $region40: #{tpu_custom_call.1} parent=5 // pred_fallthru
        _
      %p742 = scmp.le.s32.totalorder 2, %s15
      // Predicated region
      $region45: #{tpu_custom_call.1} parent=5 // pred_check
        %p743 = pneg %p742
      $region46: #{tpu_custom_call.1} parent=5 // pred_check_branch
        %745 = sbr.rel (%p743) target = $region48
      $region47: #{tpu_custom_call.1} parent=5 // pred_region
        %s746 = ssub.s32 %s15, 2
        // Predicated region
        $region49: #{tpu_custom_call.1} parent=47 // pred_check
          %p747 = pneg %p154
        $region50: #{tpu_custom_call.1} parent=47 // pred_check_branch
          %749 = sbr.rel (%p747) target = $region52
        $region51: #{tpu_custom_call.1} parent=47 // pred_region
          %s750 = sand.u32 %s139, 1
          %s751 = scalar_lea.sflag [#allocation4], %s750
          %s752 = sand.u32 %s139, 1
          %s753 = smul.addr %s752, 2
          %s754 = scalar_lea.vmem [#allocation3], %s753
          %755 = dma.done %s751, 32
        $region52: #{tpu_custom_call.1} parent=47 // pred_fallthru
          _
      $region48: #{tpu_custom_call.1} parent=5 // pred_fallthru
        _
    $region6: #{tpu_custom_call.1} parent=1 // loop_footer
      %s19 = sadd.s32 1, %s15
    $region7: #{tpu_custom_call.1} parent=1 // loop_footer_branch
      %14 = sbr.rel target = $region3
    $region8: #{tpu_custom_call.1} parent=1 // loop_exit
      _
    %756 = vsyncpa [#allocation4], 1
    %s757 = scalar_lea.sflag [#allocation4], 1
    %758 = vsyncpa %s757, 1

</llo_original>
